<compile_context>
chip_gen: v7x
topology: tpu7x:2x2x1
jax: 0.10.0
libtpu: 0.0.40
codegen_flags: <defaults>
</compile_context>

<pallas_src>
import functools

import jax
import jax.numpy as jnp
from jax import lax
from jax.experimental import pallas as pl
from jax.experimental.pallas import tpu as pltpu

P_DROP = 0.1
KEEP_PROB = 1.0 - P_DROP
_INV_KEEP = 1.0 / KEEP_PROB
# keep element iff hashed uint32 bits >= floor(p * 2^32)  (P(keep) ~= 0.9)
_THRESHOLD = int(P_DROP * (2 ** 32))

# ~2 MiB per input tile: big enough to amortize the ~0.35 us per-grid-step
# overhead, small enough that in+out double buffering (~8 MiB) fits v5e's
# 16 MiB default scoped VMEM and leaves headroom for the integer-hash
# intermediates under v7x's tighter VMEM budget.
_TARGET_TILE_BYTES = 2 * 1024 * 1024


def _dropout_kernel(seed_ref, x_ref, o_ref):
    """Dropout on one (block_rows, lane) tile.

    Random bits come from the lowbias32 hash of (global element index mixed
    with seed): deterministic, per-element independent, no cross-step state.
    """
    block_rows, lane = x_ref.shape
    i = pl.program_id(0).astype(jnp.uint32)

    row = lax.broadcasted_iota(jnp.uint32, (block_rows, lane), 0)
    col = lax.broadcasted_iota(jnp.uint32, (block_rows, lane), 1)
    # Global linear element index (mod 2^32 is fine for hashing).
    idx = (i * jnp.uint32(block_rows) + row) * jnp.uint32(lane) + col

    seed = seed_ref[0].astype(jnp.uint32)
    z = idx + seed * jnp.uint32(0x9E3779B9)
    # lowbias32 finalizer: strong avalanche on sequential counters.
    z = z ^ (z >> 16)
    z = z * jnp.uint32(0x7FEB352D)
    z = z ^ (z >> 15)
    z = z * jnp.uint32(0x846CA68B)
    z = z ^ (z >> 16)

    keep = z >= jnp.uint32(_THRESHOLD)
    x = x_ref[...]
    o_ref[...] = jnp.where(keep, x * _INV_KEEP, 0.0).astype(o_ref.dtype)


def _round_up(a, b):
    return ((a + b - 1) // b) * b


def _cdiv(a, b):
    return -(-a // b)


@jax.jit
def dropout_pallas(x, seed):
    """Dropout(p=0.1), training mode (matches torch.nn.Dropout forward).

    x:    float array of any shape.
    seed: int32 array of shape (1,).  Vary per training step; reusing the
          same seed reproduces the identical dropout mask.
    """
    orig_shape = x.shape
    numel = x.size
    itemsize = jnp.dtype(x.dtype).itemsize
    lastdim = orig_shape[-1] if x.ndim >= 1 else 1

    # Fast path: trailing dim already lane-dense (multiple of 128) and the
    # collapsed leading dims are a multiple of 8 -> metadata-only reshape,
    # zero padding, zero output slicing.  The module's real (1,12,384,384)
    # input lands here: lane = 384 = 3*128, rows = 4608.
    if x.ndim >= 2 and lastdim % 128 == 0 and (numel // lastdim) % 8 == 0:
        lane = lastdim
        rows = numel // lane
        x2d = x.reshape(rows, lane)
        pad = 0
    else:
        # Fallback for genuinely ragged shapes: flatten, pad to a multiple of
        # 8*128 elements (<= 1023 extra), slice the result back afterwards.
        lane = 128
        padded = _round_up(max(numel, 1), 8 * lane)
        pad = padded - numel
        x_flat = x.reshape(-1)
        if pad:
            x_flat = jnp.pad(x_flat, (0, pad))
        rows = padded // lane
        x2d = x_flat.reshape(rows, lane)

    # ~2 MiB tiles; block rows a multiple of 8 (the (8,128) tiling rule).
    block_rows = max(8, (_TARGET_TILE_BYTES // (lane * itemsize)) // 8 * 8)
    block_rows = min(block_rows, rows)
    n_blocks = _cdiv(rows, block_rows)
    # v7x: prefer an even number of grid steps so both TensorCores get equal
    # work when the "parallel" axis is sharded across them.
    if n_blocks > 1 and n_blocks % 2 == 1:
        block_rows = max(8, _round_up(_cdiv(rows, n_blocks + 1), 8))
        n_blocks = _cdiv(rows, block_rows)

    out2d = pl.pallas_call(
        _dropout_kernel,
        out_shape=jax.ShapeDtypeStruct((rows, lane), x.dtype),
        grid_spec=pltpu.PrefetchScalarGridSpec(
            num_scalar_prefetch=1,
            grid=(n_blocks,),
            in_specs=[pl.BlockSpec((block_rows, lane),
                                   lambda i, seed_ref: (i, 0))],
            out_specs=pl.BlockSpec((block_rows, lane),
                                   lambda i, seed_ref: (i, 0)),
        ),
        compiler_params=pltpu.CompilerParams(
            dimension_semantics=("parallel",),
        ),
        cost_estimate=pl.CostEstimate(
            flops=12 * rows * lane,
            transcendentals=0,
            bytes_accessed=2 * rows * lane * itemsize,
        ),
    )(seed, x2d)

    out_flat = out2d.reshape(-1)
    if pad:
        out_flat = out_flat[:numel]
    return out_flat.reshape(orig_shape)


if __name__ == "__main__":
    key = jax.random.PRNGKey(0)
    # Small shape consistent with the module's (1, 12, 384, 384) input: keep
    # the lane-dense 384-wide trailing dim, shrink the leading dims.
    x = jax.random.normal(key, (1, 4, 32, 384), dtype=jnp.float32)
    seed = jnp.array([0], dtype=jnp.int32)

    y = jax.block_until_ready(dropout_pallas(x, seed))

    # Sanity: surviving elements are scaled copies, dropped ones are zero.
    # (Treating y != 0 as "kept" is safe: P(x == 0 exactly) ~ 0 for gaussians.)
    assert y.shape == x.shape
    kept = y != 0
    assert jnp.allclose(y[kept], x[kept] / KEEP_PROB, rtol=1e-6, atol=1e-6)
    drop_frac = float(1.0 - jnp.mean(kept.astype(jnp.float32)))
    assert 0.03 < drop_frac < 0.25, f"unexpected drop fraction {drop_frac}"

    print("KERNEL_OK")
</pallas_src>

<mosaic_0001>
module attributes {stable_mosaic.version = 11 : i64} {
  func.func @_dropout_kernel(%arg0: i32, %arg1: memref<1xi32, #tpu.memory_space<smem>>, %arg2: memref<128x384xf32, #tpu.memory_space<vmem>>, %arg3: memref<128x384xf32, #tpu.memory_space<vmem>>) attributes {dimension_semantics = [#tpu.dimension_semantics<parallel>], iteration_bounds = array<i64: 1>, scalar_prefetch = 1 : i64, scratch_operands = 0 : i64, tpu.core_type = #tpu.core_type<tc>, window_params = [{transform_indices = @transform_0, window_bounds = array<i64: 128, 384>}, {transform_indices = @transform_1, window_bounds = array<i64: 128, 384>}]} {
    %0 = tpu.iota {dimensions = array<i32: 0>} : vector<128x384xi32>
    %1 = tpu.iota {dimensions = array<i32: 1>} : vector<128x384xi32>
    %c128_i32 = arith.constant 128 : i32
    %2 = arith.muli %arg0, %c128_i32 : i32
    %3 = vector.broadcast %2 : i32 to vector<128x384xi32>
    %4 = arith.addi %3, %0 : vector<128x384xi32>
    %c384_i32 = arith.constant 384 : i32
    %5 = vector.broadcast %c384_i32 : i32 to vector<128x384xi32>
    %6 = arith.muli %4, %5 : vector<128x384xi32>
    %7 = arith.addi %6, %1 : vector<128x384xi32>
    %c0 = arith.constant 0 : index
    %8 = memref.load %arg1[%c0] : memref<1xi32, #tpu.memory_space<smem>>
    %c-1640531527_i32 = arith.constant -1640531527 : i32
    %9 = arith.muli %8, %c-1640531527_i32 : i32
    %10 = vector.broadcast %9 : i32 to vector<128x384xi32>
    %11 = arith.addi %7, %10 : vector<128x384xi32>
    %c16_i32 = arith.constant 16 : i32
    %12 = vector.broadcast %c16_i32 : i32 to vector<128x384xi32>
    %13 = arith.shrui %11, %12 : vector<128x384xi32>
    %14 = arith.xori %11, %13 : vector<128x384xi32>
    %c2146121005_i32 = arith.constant 2146121005 : i32
    %15 = vector.broadcast %c2146121005_i32 : i32 to vector<128x384xi32>
    %16 = arith.muli %14, %15 : vector<128x384xi32>
    %c15_i32 = arith.constant 15 : i32
    %17 = vector.broadcast %c15_i32 : i32 to vector<128x384xi32>
    %18 = arith.shrui %16, %17 : vector<128x384xi32>
    %19 = arith.xori %16, %18 : vector<128x384xi32>
    %c-2073254261_i32 = arith.constant -2073254261 : i32
    %20 = vector.broadcast %c-2073254261_i32 : i32 to vector<128x384xi32>
    %21 = arith.muli %19, %20 : vector<128x384xi32>
    %c16_i32_0 = arith.constant 16 : i32
    %22 = vector.broadcast %c16_i32_0 : i32 to vector<128x384xi32>
    %23 = arith.shrui %21, %22 : vector<128x384xi32>
    %24 = arith.xori %21, %23 : vector<128x384xi32>
    %c429496729_i32 = arith.constant 429496729 : i32
    %25 = vector.broadcast %c429496729_i32 : i32 to vector<128x384xi32>
    %26 = arith.cmpi uge, %24, %25 : vector<128x384xi32>
    %c0_1 = arith.constant 0 : index
    %c0_2 = arith.constant 0 : index
    %27 = vector.load %arg2[%c0_1, %c0_2] : memref<128x384xf32, #tpu.memory_space<vmem>>, vector<128x384xf32>
    %cst = arith.constant 1.11111116 : f32
    %28 = vector.broadcast %cst : f32 to vector<128x384xf32>
    %29 = arith.mulf %27, %28 : vector<128x384xf32>
    %cst_3 = arith.constant 0.000000e+00 : f32
    %30 = vector.broadcast %cst_3 : f32 to vector<128x384xf32>
    %31 = arith.select %26, %29, %30 : vector<128x384xi1>, vector<128x384xf32>
    %c0_4 = arith.constant 0 : index
    %c0_5 = arith.constant 0 : index
    %32 = vector.load %arg3[%c0_4, %c0_5] : memref<128x384xf32, #tpu.memory_space<vmem>>, vector<128x384xf32>
    tpu.vector_store %arg3[%c0_4, %c0_5], %31 {strides = array<i32>} : memref<128x384xf32, #tpu.memory_space<vmem>>, vector<128x384xf32>,
    return
  }
  func.func @transform_0(%arg0: i32, %arg1: memref<1xi32, #tpu.memory_space<smem>>) -> (i32, i32) {
    %c0_i32 = arith.constant 0 : i32
    %c0_i32_0 = arith.constant 0 : i32
    return %arg0, %c0_i32 : i32, i32
  }
  func.func @transform_1(%arg0: i32, %arg1: memref<1xi32, #tpu.memory_space<smem>>) -> (i32, i32) {
    %c0_i32 = arith.constant 0 : i32
    %c0_i32_0 = arith.constant 0 : i32
    return %arg0, %c0_i32 : i32, i32
  }
}

</mosaic_0001>

<llo_original>
// kernel: dropout_pallas.1
$region0: #{dropout_pallas.1}
  #allocation0 [shape = 'u32[]', space=smem, size = 0x4, offset = 0x4, fixed_abs, tag = 'smem constant byte address 0x4 - core index']
  #allocation1 [shape = 'u32[144,128]{1,0:T(1,128)}', space=vmem, size = 0x12000, scoped, tag = 'internal scratch']
  #allocation2 [shape = 's32[1]{0}', space=sflag, size = 0x4, scoped, tag = 'scoped memory for dropout_pallas.1']
  #allocation3 [shape = 's32[1]{0:T(128)S(6)}', space=smem, size = 0x200, scoped, tag = 'prefetched SMEM operand 0']
  %s0 = inlined_call_operand.<no memory space> [shape: s32[1], index: 0, kind: input, shape index: {}]
  %s1 = inlined_call_operand.hbm [shape: f32[128,384], index: 1, kind: input, shape index: {}]
  %s2 = inlined_call_operand.hbm [shape: f32[128,384], index: 2, kind: output, shape index: {}]
  %s3 = sld [smem:[#allocation0]]
  $region18: #{dropout_pallas.1} parent=0
    _
  %s5 = ssub.s32 1, %s3
  %s6 = scalar_select 0, %s5, %s3
  %7 = sst [smem:[#allocation3]] %s0
  $region1: #{dropout_pallas.1} parent=0
    #allocation4 [shape = 'u8[196608]{0}', space=vmem, size = 0x30000, scoped, tag = 'input window, operand 1, single buffered']
    #allocation5 [shape = 's32[1]{0}', space=sflag, size = 0x4, scoped, tag = 'scoped memory for dropout_pallas.1']
    #allocation6 [shape = 's32[1]{0}', space=sflag, size = 0x4, scoped, tag = 'scoped memory for dropout_pallas.1']
    #allocation7 [shape = 'u8[196608]{0}', space=vmem, size = 0x30000, scoped, tag = 'output window, operand 0, single buffered']
    %8 = vsyncpa [#allocation5], 0
    %9 = vsyncpa [#allocation6], 0
    // Predicated region
    $region2: #{dropout_pallas.1} parent=1 // pred_check
      _
    $region3: #{dropout_pallas.1} parent=1 // pred_check_branch
      %11 = sbr.rel (0) target = $region5
    $region4: #{dropout_pallas.1} parent=1 // pred_region
      %s13 = ssub.s32 6144, 6144
      %14 = vsyncadd [#allocation5], %s13
      %s15 = sshll.u32 [#allocation4], 4
      %s16 = int_to_ptr.vmem [resolvable:$true] %s15
      %21 = dma.hbm_to_vmem [thread:$0]  %s1, 6144, %s16, [#allocation5], 384, 384, 24
    $region5: #{dropout_pallas.1} parent=1 // pred_fallthru
      _
    // Predicated region
    $region6: #{dropout_pallas.1} parent=1 // pred_check
      _
    $region7: #{dropout_pallas.1} parent=1 // pred_check_branch
      %23 = sbr.rel (0) target = $region9
    $region8: #{dropout_pallas.1} parent=1 // pred_region
      %24 = dma.done [#allocation5], 6144
    $region9: #{dropout_pallas.1} parent=1 // pred_fallthru
      _
    %v25 = vlaneseq
    %v26 = vshrl.u32 %v25, 7
    %v27 = vadd.s32 %v26, 8
    %v28 = vadd.s32 %v26, 16
    %v29 = vadd.s32 %v26, 24
    %v30 = vadd.s32 %v26, 32
    %v31 = vadd.s32 %v26, 40
    %v32 = vadd.s32 %v26, 48
    %v33 = vadd.s32 %v26, 56
    %v34 = vadd.s32 %v26, 64
    %v35 = vadd.s32 %v26, 72
    %v36 = vadd.s32 %v26, 80
    %v37 = vadd.s32 %v26, 88
    %v38 = vadd.s32 %v26, 96
    %v39 = vadd.s32 %v26, 104
    %v40 = vadd.s32 %v26, 112
    %v41 = vadd.s32 %v26, 120
    %v42 = vlaneseq
    %v43 = vand.u32 %v42, 127
    %v44 = vadd.s32 %v43, 128
    %v45 = vadd.s32 %v43, 256
    %s46 = smul.u32 0, 128
    %v47 = vstv %s46
    %v48 = vadd.s32 %v47, %v26
    %v49 = vadd.s32 %v47, %v27
    %v50 = vadd.s32 %v47, %v28
    %v51 = vadd.s32 %v47, %v29
    %v52 = vadd.s32 %v47, %v30
    %v53 = vadd.s32 %v47, %v31
    %v54 = vadd.s32 %v47, %v32
    %v55 = vadd.s32 %v47, %v33
    %v56 = vadd.s32 %v47, %v34
    %v57 = vadd.s32 %v47, %v35
    %v58 = vadd.s32 %v47, %v36
    %v59 = vadd.s32 %v47, %v37
    %v60 = vadd.s32 %v47, %v38
    %v61 = vadd.s32 %v47, %v39
    %v62 = vadd.s32 %v47, %v40
    %v63 = vadd.s32 %v47, %v41
    %v64 = vmul.u32 %v48, 384
    %v65 = vmul.u32 %v49, 384
    %v66 = vmul.u32 %v50, 384
    %v67 = vmul.u32 %v51, 384
    %v68 = vmul.u32 %v52, 384
    %v69 = vmul.u32 %v53, 384
    %v70 = vmul.u32 %v54, 384
    %v71 = vmul.u32 %v55, 384
    %v72 = vmul.u32 %v56, 384
    %v73 = vmul.u32 %v57, 384
    %v74 = vmul.u32 %v58, 384
    %v75 = vmul.u32 %v59, 384
    %v76 = vmul.u32 %v60, 384
    %v77 = vmul.u32 %v61, 384
    %v78 = vmul.u32 %v62, 384
    %v79 = vmul.u32 %v63, 384
    %v80 = vadd.s32 %v64, %v43
    %v81 = vadd.s32 %v64, %v44
    %v82 = vadd.s32 %v64, %v45
    %v83 = vadd.s32 %v65, %v43
    %v84 = vadd.s32 %v65, %v44
    %v85 = vadd.s32 %v65, %v45
    %v86 = vadd.s32 %v66, %v43
    %v87 = vadd.s32 %v66, %v44
    %v88 = vadd.s32 %v66, %v45
    %v89 = vadd.s32 %v67, %v43
    %v90 = vadd.s32 %v67, %v44
    %v91 = vadd.s32 %v67, %v45
    %v92 = vadd.s32 %v68, %v43
    %v93 = vadd.s32 %v68, %v44
    %v94 = vadd.s32 %v68, %v45
    %v95 = vadd.s32 %v69, %v43
    %v96 = vadd.s32 %v69, %v44
    %v97 = vadd.s32 %v69, %v45
    %v98 = vadd.s32 %v70, %v43
    %v99 = vadd.s32 %v70, %v44
    %v100 = vadd.s32 %v70, %v45
    %v101 = vadd.s32 %v71, %v43
    %v102 = vadd.s32 %v71, %v44
    %v103 = vadd.s32 %v71, %v45
    %v104 = vadd.s32 %v72, %v43
    %v105 = vadd.s32 %v72, %v44
    %v106 = vadd.s32 %v72, %v45
    %v107 = vadd.s32 %v73, %v43
    %v108 = vadd.s32 %v73, %v44
    %v109 = vadd.s32 %v73, %v45
    %v110 = vadd.s32 %v74, %v43
    %v111 = vadd.s32 %v74, %v44
    %v112 = vadd.s32 %v74, %v45
    %v113 = vadd.s32 %v75, %v43
    %v114 = vadd.s32 %v75, %v44
    %v115 = vadd.s32 %v75, %v45
    %v116 = vadd.s32 %v76, %v43
    %v117 = vadd.s32 %v76, %v44
    %v118 = vadd.s32 %v76, %v45
    %v119 = vadd.s32 %v77, %v43
    %v120 = vadd.s32 %v77, %v44
    %v121 = vadd.s32 %v77, %v45
    %v122 = vadd.s32 %v78, %v43
    %v123 = vadd.s32 %v78, %v44
    %v124 = vadd.s32 %v78, %v45
    %v125 = vadd.s32 %v79, %v43
    %v126 = vadd.s32 %v79, %v44
    %v127 = vadd.s32 %v79, %v45
    %s128 = sld [smem:[#allocation3]]
    %s129 = smul.u32 %s128, 2654435769
    %v130 = vstv %s129
    %v131 = vadd.s32 %v80, %v130
    %v132 = vadd.s32 %v81, %v130
    %v133 = vadd.s32 %v82, %v130
    %v134 = vadd.s32 %v83, %v130
    %v135 = vadd.s32 %v84, %v130
    %v136 = vadd.s32 %v85, %v130
    %v137 = vadd.s32 %v86, %v130
    %v138 = vadd.s32 %v87, %v130
    %v139 = vadd.s32 %v88, %v130
    %v140 = vadd.s32 %v89, %v130
    %v141 = vadd.s32 %v90, %v130
    %v142 = vadd.s32 %v91, %v130
    %v143 = vadd.s32 %v92, %v130
    %v144 = vadd.s32 %v93, %v130
    %v145 = vadd.s32 %v94, %v130
    %v146 = vadd.s32 %v95, %v130
    %v147 = vadd.s32 %v96, %v130
    %v148 = vadd.s32 %v97, %v130
    %v149 = vadd.s32 %v98, %v130
    %v150 = vadd.s32 %v99, %v130
    %v151 = vadd.s32 %v100, %v130
    %v152 = vadd.s32 %v101, %v130
    %v153 = vadd.s32 %v102, %v130
    %v154 = vadd.s32 %v103, %v130
    %v155 = vadd.s32 %v104, %v130
    %v156 = vadd.s32 %v105, %v130
    %v157 = vadd.s32 %v106, %v130
    %v158 = vadd.s32 %v107, %v130
    %v159 = vadd.s32 %v108, %v130
    %v160 = vadd.s32 %v109, %v130
    %v161 = vadd.s32 %v110, %v130
    %v162 = vadd.s32 %v111, %v130
    %v163 = vadd.s32 %v112, %v130
    %v164 = vadd.s32 %v113, %v130
    %v165 = vadd.s32 %v114, %v130
    %v166 = vadd.s32 %v115, %v130
    %v167 = vadd.s32 %v116, %v130
    %v168 = vadd.s32 %v117, %v130
    %v169 = vadd.s32 %v118, %v130
    %v170 = vadd.s32 %v119, %v130
    %v171 = vadd.s32 %v120, %v130
    %v172 = vadd.s32 %v121, %v130
    %v173 = vadd.s32 %v122, %v130
    %v174 = vadd.s32 %v123, %v130
    %v175 = vadd.s32 %v124, %v130
    %v176 = vadd.s32 %v125, %v130
    %v177 = vadd.s32 %v126, %v130
    %v178 = vadd.s32 %v127, %v130
    %v179 = vshrl.u32 %v131, 16
    %v180 = vshrl.u32 %v132, 16
    %v181 = vshrl.u32 %v133, 16
    %v182 = vshrl.u32 %v134, 16
    %v183 = vshrl.u32 %v135, 16
    %v184 = vshrl.u32 %v136, 16
    %v185 = vshrl.u32 %v137, 16
    %v186 = vshrl.u32 %v138, 16
    %v187 = vshrl.u32 %v139, 16
    %v188 = vshrl.u32 %v140, 16
    %v189 = vshrl.u32 %v141, 16
    %v190 = vshrl.u32 %v142, 16
    %v191 = vshrl.u32 %v143, 16
    %v192 = vshrl.u32 %v144, 16
    %v193 = vshrl.u32 %v145, 16
    %v194 = vshrl.u32 %v146, 16
    %v195 = vshrl.u32 %v147, 16
    %v196 = vshrl.u32 %v148, 16
    %v197 = vshrl.u32 %v149, 16
    %v198 = vshrl.u32 %v150, 16
    %v199 = vshrl.u32 %v151, 16
    %v200 = vshrl.u32 %v152, 16
    %v201 = vshrl.u32 %v153, 16
    %v202 = vshrl.u32 %v154, 16
    %v203 = vshrl.u32 %v155, 16
    %v204 = vshrl.u32 %v156, 16
    %v205 = vshrl.u32 %v157, 16
    %v206 = vshrl.u32 %v158, 16
    %v207 = vshrl.u32 %v159, 16
    %v208 = vshrl.u32 %v160, 16
    %v209 = vshrl.u32 %v161, 16
    %v210 = vshrl.u32 %v162, 16
    %v211 = vshrl.u32 %v163, 16
    %v212 = vshrl.u32 %v164, 16
    %v213 = vshrl.u32 %v165, 16
    %v214 = vshrl.u32 %v166, 16
    %v215 = vshrl.u32 %v167, 16
    %v216 = vshrl.u32 %v168, 16
    %v217 = vshrl.u32 %v169, 16
    %v218 = vshrl.u32 %v170, 16
    %v219 = vshrl.u32 %v171, 16
    %v220 = vshrl.u32 %v172, 16
    %v221 = vshrl.u32 %v173, 16
    %v222 = vshrl.u32 %v174, 16
    %v223 = vshrl.u32 %v175, 16
    %v224 = vshrl.u32 %v176, 16
    %v225 = vshrl.u32 %v177, 16
    %v226 = vshrl.u32 %v178, 16
    %v227 = vxor.u32 %v131, %v179
    %v228 = vxor.u32 %v132, %v180
    %v229 = vxor.u32 %v133, %v181
    %v230 = vxor.u32 %v134, %v182
    %v231 = vxor.u32 %v135, %v183
    %v232 = vxor.u32 %v136, %v184
    %v233 = vxor.u32 %v137, %v185
    %v234 = vxor.u32 %v138, %v186
    %v235 = vxor.u32 %v139, %v187
    %v236 = vxor.u32 %v140, %v188
    %v237 = vxor.u32 %v141, %v189
    %v238 = vxor.u32 %v142, %v190
    %v239 = vxor.u32 %v143, %v191
    %v240 = vxor.u32 %v144, %v192
    %v241 = vxor.u32 %v145, %v193
    %v242 = vxor.u32 %v146, %v194
    %v243 = vxor.u32 %v147, %v195
    %v244 = vxor.u32 %v148, %v196
    %v245 = vxor.u32 %v149, %v197
    %v246 = vxor.u32 %v150, %v198
    %v247 = vxor.u32 %v151, %v199
    %v248 = vxor.u32 %v152, %v200
    %v249 = vxor.u32 %v153, %v201
    %v250 = vxor.u32 %v154, %v202
    %v251 = vxor.u32 %v155, %v203
    %v252 = vxor.u32 %v156, %v204
    %v253 = vxor.u32 %v157, %v205
    %v254 = vxor.u32 %v158, %v206
    %v255 = vxor.u32 %v159, %v207
    %v256 = vxor.u32 %v160, %v208
    %v257 = vxor.u32 %v161, %v209
    %v258 = vxor.u32 %v162, %v210
    %v259 = vxor.u32 %v163, %v211
    %v260 = vxor.u32 %v164, %v212
    %v261 = vxor.u32 %v165, %v213
    %v262 = vxor.u32 %v166, %v214
    %v263 = vxor.u32 %v167, %v215
    %v264 = vxor.u32 %v168, %v216
    %v265 = vxor.u32 %v169, %v217
    %v266 = vxor.u32 %v170, %v218
    %v267 = vxor.u32 %v171, %v219
    %v268 = vxor.u32 %v172, %v220
    %v269 = vxor.u32 %v173, %v221
    %v270 = vxor.u32 %v174, %v222
    %v271 = vxor.u32 %v175, %v223
    %v272 = vxor.u32 %v176, %v224
    %v273 = vxor.u32 %v177, %v225
    %v274 = vxor.u32 %v178, %v226
    %v275 = vmul.u32 %v227, 2146121005
    %v276 = vmul.u32 %v228, 2146121005
    %v277 = vmul.u32 %v229, 2146121005
    %v278 = vmul.u32 %v230, 2146121005
    %v279 = vmul.u32 %v231, 2146121005
    %v280 = vmul.u32 %v232, 2146121005
    %v281 = vmul.u32 %v233, 2146121005
    %v282 = vmul.u32 %v234, 2146121005
    %v283 = vmul.u32 %v235, 2146121005
    %v284 = vmul.u32 %v236, 2146121005
    %v285 = vmul.u32 %v237, 2146121005
    %v286 = vmul.u32 %v238, 2146121005
    %v287 = vmul.u32 %v239, 2146121005
    %v288 = vmul.u32 %v240, 2146121005
    %v289 = vmul.u32 %v241, 2146121005
    %v290 = vmul.u32 %v242, 2146121005
    %v291 = vmul.u32 %v243, 2146121005
    %v292 = vmul.u32 %v244, 2146121005
    %v293 = vmul.u32 %v245, 2146121005
    %v294 = vmul.u32 %v246, 2146121005
    %v295 = vmul.u32 %v247, 2146121005
    %v296 = vmul.u32 %v248, 2146121005
    %v297 = vmul.u32 %v249, 2146121005
    %v298 = vmul.u32 %v250, 2146121005
    %v299 = vmul.u32 %v251, 2146121005
    %v300 = vmul.u32 %v252, 2146121005
    %v301 = vmul.u32 %v253, 2146121005
    %v302 = vmul.u32 %v254, 2146121005
    %v303 = vmul.u32 %v255, 2146121005
    %v304 = vmul.u32 %v256, 2146121005
    %v305 = vmul.u32 %v257, 2146121005
    %v306 = vmul.u32 %v258, 2146121005
    %v307 = vmul.u32 %v259, 2146121005
    %v308 = vmul.u32 %v260, 2146121005
    %v309 = vmul.u32 %v261, 2146121005
    %v310 = vmul.u32 %v262, 2146121005
    %v311 = vmul.u32 %v263, 2146121005
    %v312 = vmul.u32 %v264, 2146121005
    %v313 = vmul.u32 %v265, 2146121005
    %v314 = vmul.u32 %v266, 2146121005
    %v315 = vmul.u32 %v267, 2146121005
    %v316 = vmul.u32 %v268, 2146121005
    %v317 = vmul.u32 %v269, 2146121005
    %v318 = vmul.u32 %v270, 2146121005
    %v319 = vmul.u32 %v271, 2146121005
    %v320 = vmul.u32 %v272, 2146121005
    %v321 = vmul.u32 %v273, 2146121005
    %v322 = vmul.u32 %v274, 2146121005
    %v323 = vshrl.u32 %v275, 15
    %v324 = vshrl.u32 %v276, 15
    %v325 = vshrl.u32 %v277, 15
    %v326 = vshrl.u32 %v278, 15
    %v327 = vshrl.u32 %v279, 15
    %v328 = vshrl.u32 %v280, 15
    %v329 = vshrl.u32 %v281, 15
    %v330 = vshrl.u32 %v282, 15
    %v331 = vshrl.u32 %v283, 15
    %v332 = vshrl.u32 %v284, 15
    %v333 = vshrl.u32 %v285, 15
    %v334 = vshrl.u32 %v286, 15
    %v335 = vshrl.u32 %v287, 15
    %v336 = vshrl.u32 %v288, 15
    %v337 = vshrl.u32 %v289, 15
    %v338 = vshrl.u32 %v290, 15
    %v339 = vshrl.u32 %v291, 15
    %v340 = vshrl.u32 %v292, 15
    %v341 = vshrl.u32 %v293, 15
    %v342 = vshrl.u32 %v294, 15
    %v343 = vshrl.u32 %v295, 15
    %v344 = vshrl.u32 %v296, 15
    %v345 = vshrl.u32 %v297, 15
    %v346 = vshrl.u32 %v298, 15
    %v347 = vshrl.u32 %v299, 15
    %v348 = vshrl.u32 %v300, 15
    %v349 = vshrl.u32 %v301, 15
    %v350 = vshrl.u32 %v302, 15
    %v351 = vshrl.u32 %v303, 15
    %v352 = vshrl.u32 %v304, 15
    %v353 = vshrl.u32 %v305, 15
    %v354 = vshrl.u32 %v306, 15
    %v355 = vshrl.u32 %v307, 15
    %v356 = vshrl.u32 %v308, 15
    %v357 = vshrl.u32 %v309, 15
    %v358 = vshrl.u32 %v310, 15
    %v359 = vshrl.u32 %v311, 15
    %v360 = vshrl.u32 %v312, 15
    %v361 = vshrl.u32 %v313, 15
    %v362 = vshrl.u32 %v314, 15
    %v363 = vshrl.u32 %v315, 15
    %v364 = vshrl.u32 %v316, 15
    %v365 = vshrl.u32 %v317, 15
    %v366 = vshrl.u32 %v318, 15
    %v367 = vshrl.u32 %v319, 15
    %v368 = vshrl.u32 %v320, 15
    %v369 = vshrl.u32 %v321, 15
    %v370 = vshrl.u32 %v322, 15
    %v371 = vxor.u32 %v275, %v323
    %v372 = vxor.u32 %v276, %v324
    %v373 = vxor.u32 %v277, %v325
    %v374 = vxor.u32 %v278, %v326
    %v375 = vxor.u32 %v279, %v327
    %v376 = vxor.u32 %v280, %v328
    %v377 = vxor.u32 %v281, %v329
    %v378 = vxor.u32 %v282, %v330
    %v379 = vxor.u32 %v283, %v331
    %v380 = vxor.u32 %v284, %v332
    %v381 = vxor.u32 %v285, %v333
    %v382 = vxor.u32 %v286, %v334
    %v383 = vxor.u32 %v287, %v335
    %v384 = vxor.u32 %v288, %v336
    %v385 = vxor.u32 %v289, %v337
    %v386 = vxor.u32 %v290, %v338
    %v387 = vxor.u32 %v291, %v339
    %v388 = vxor.u32 %v292, %v340
    %v389 = vxor.u32 %v293, %v341
    %v390 = vxor.u32 %v294, %v342
    %v391 = vxor.u32 %v295, %v343
    %v392 = vxor.u32 %v296, %v344
    %v393 = vxor.u32 %v297, %v345
    %v394 = vxor.u32 %v298, %v346
    %v395 = vxor.u32 %v299, %v347
    %v396 = vxor.u32 %v300, %v348
    %v397 = vxor.u32 %v301, %v349
    %v398 = vxor.u32 %v302, %v350
    %v399 = vxor.u32 %v303, %v351
    %v400 = vxor.u32 %v304, %v352
    %v401 = vxor.u32 %v305, %v353
    %v402 = vxor.u32 %v306, %v354
    %v403 = vxor.u32 %v307, %v355
    %v404 = vxor.u32 %v308, %v356
    %v405 = vxor.u32 %v309, %v357
    %v406 = vxor.u32 %v310, %v358
    %v407 = vxor.u32 %v311, %v359
    %v408 = vxor.u32 %v312, %v360
    %v409 = vxor.u32 %v313, %v361
    %v410 = vxor.u32 %v314, %v362
    %v411 = vxor.u32 %v315, %v363
    %v412 = vxor.u32 %v316, %v364
    %v413 = vxor.u32 %v317, %v365
    %v414 = vxor.u32 %v318, %v366
    %v415 = vxor.u32 %v319, %v367
    %v416 = vxor.u32 %v320, %v368
    %v417 = vxor.u32 %v321, %v369
    %v418 = vxor.u32 %v322, %v370
    %v419 = vmul.u32 %v371, 2221713035
    %v420 = vmul.u32 %v372, 2221713035
    %v421 = vmul.u32 %v373, 2221713035
    %v422 = vmul.u32 %v374, 2221713035
    %v423 = vmul.u32 %v375, 2221713035
    %v424 = vmul.u32 %v376, 2221713035
    %v425 = vmul.u32 %v377, 2221713035
    %v426 = vmul.u32 %v378, 2221713035
    %v427 = vmul.u32 %v379, 2221713035
    %v428 = vmul.u32 %v380, 2221713035
    %v429 = vmul.u32 %v381, 2221713035
    %v430 = vmul.u32 %v382, 2221713035
    %v431 = vmul.u32 %v383, 2221713035
    %v432 = vmul.u32 %v384, 2221713035
    %v433 = vmul.u32 %v385, 2221713035
    %v434 = vmul.u32 %v386, 2221713035
    %v435 = vmul.u32 %v387, 2221713035
    %v436 = vmul.u32 %v388, 2221713035
    %v437 = vmul.u32 %v389, 2221713035
    %v438 = vmul.u32 %v390, 2221713035
    %v439 = vmul.u32 %v391, 2221713035
    %v440 = vmul.u32 %v392, 2221713035
    %v441 = vmul.u32 %v393, 2221713035
    %v442 = vmul.u32 %v394, 2221713035
    %v443 = vmul.u32 %v395, 2221713035
    %v444 = vmul.u32 %v396, 2221713035
    %v445 = vmul.u32 %v397, 2221713035
    %v446 = vmul.u32 %v398, 2221713035
    %v447 = vmul.u32 %v399, 2221713035
    %v448 = vmul.u32 %v400, 2221713035
    %v449 = vmul.u32 %v401, 2221713035
    %v450 = vmul.u32 %v402, 2221713035
    %v451 = vmul.u32 %v403, 2221713035
    %v452 = vmul.u32 %v404, 2221713035
    %v453 = vmul.u32 %v405, 2221713035
    %v454 = vmul.u32 %v406, 2221713035
    %v455 = vmul.u32 %v407, 2221713035
    %v456 = vmul.u32 %v408, 2221713035
    %v457 = vmul.u32 %v409, 2221713035
    %v458 = vmul.u32 %v410, 2221713035
    %v459 = vmul.u32 %v411, 2221713035
    %v460 = vmul.u32 %v412, 2221713035
    %v461 = vmul.u32 %v413, 2221713035
    %v462 = vmul.u32 %v414, 2221713035
    %v463 = vmul.u32 %v415, 2221713035
    %v464 = vmul.u32 %v416, 2221713035
    %v465 = vmul.u32 %v417, 2221713035
    %v466 = vmul.u32 %v418, 2221713035
    %v467 = vshrl.u32 %v419, 16
    %v468 = vshrl.u32 %v420, 16
    %v469 = vshrl.u32 %v421, 16
    %v470 = vshrl.u32 %v422, 16
    %v471 = vshrl.u32 %v423, 16
    %v472 = vshrl.u32 %v424, 16
    %v473 = vshrl.u32 %v425, 16
    %v474 = vshrl.u32 %v426, 16
    %v475 = vshrl.u32 %v427, 16
    %v476 = vshrl.u32 %v428, 16
    %v477 = vshrl.u32 %v429, 16
    %v478 = vshrl.u32 %v430, 16
    %v479 = vshrl.u32 %v431, 16
    %v480 = vshrl.u32 %v432, 16
    %v481 = vshrl.u32 %v433, 16
    %v482 = vshrl.u32 %v434, 16
    %v483 = vshrl.u32 %v435, 16
    %v484 = vshrl.u32 %v436, 16
    %v485 = vshrl.u32 %v437, 16
    %v486 = vshrl.u32 %v438, 16
    %v487 = vshrl.u32 %v439, 16
    %v488 = vshrl.u32 %v440, 16
    %v489 = vshrl.u32 %v441, 16
    %v490 = vshrl.u32 %v442, 16
    %v491 = vshrl.u32 %v443, 16
    %v492 = vshrl.u32 %v444, 16
    %v493 = vshrl.u32 %v445, 16
    %v494 = vshrl.u32 %v446, 16
    %v495 = vshrl.u32 %v447, 16
    %v496 = vshrl.u32 %v448, 16
    %v497 = vshrl.u32 %v449, 16
    %v498 = vshrl.u32 %v450, 16
    %v499 = vshrl.u32 %v451, 16
    %v500 = vshrl.u32 %v452, 16
    %v501 = vshrl.u32 %v453, 16
    %v502 = vshrl.u32 %v454, 16
    %v503 = vshrl.u32 %v455, 16
    %v504 = vshrl.u32 %v456, 16
    %v505 = vshrl.u32 %v457, 16
    %v506 = vshrl.u32 %v458, 16
    %v507 = vshrl.u32 %v459, 16
    %v508 = vshrl.u32 %v460, 16
    %v509 = vshrl.u32 %v461, 16
    %v510 = vshrl.u32 %v462, 16
    %v511 = vshrl.u32 %v463, 16
    %v512 = vshrl.u32 %v464, 16
    %v513 = vshrl.u32 %v465, 16
    %v514 = vshrl.u32 %v466, 16
    %v515 = vxor.u32 %v419, %v467
    %v516 = vxor.u32 %v420, %v468
    %v517 = vxor.u32 %v421, %v469
    %v518 = vxor.u32 %v422, %v470
    %v519 = vxor.u32 %v423, %v471
    %v520 = vxor.u32 %v424, %v472
    %v521 = vxor.u32 %v425, %v473
    %v522 = vxor.u32 %v426, %v474
    %v523 = vxor.u32 %v427, %v475
    %v524 = vxor.u32 %v428, %v476
    %v525 = vxor.u32 %v429, %v477
    %v526 = vxor.u32 %v430, %v478
    %v527 = vxor.u32 %v431, %v479
    %v528 = vxor.u32 %v432, %v480
    %v529 = vxor.u32 %v433, %v481
    %v530 = vxor.u32 %v434, %v482
    %v531 = vxor.u32 %v435, %v483
    %v532 = vxor.u32 %v436, %v484
    %v533 = vxor.u32 %v437, %v485
    %v534 = vxor.u32 %v438, %v486
    %v535 = vxor.u32 %v439, %v487
    %v536 = vxor.u32 %v440, %v488
    %v537 = vxor.u32 %v441, %v489
    %v538 = vxor.u32 %v442, %v490
    %v539 = vxor.u32 %v443, %v491
    %v540 = vxor.u32 %v444, %v492
    %v541 = vxor.u32 %v445, %v493
    %v542 = vxor.u32 %v446, %v494
    %v543 = vxor.u32 %v447, %v495
    %v544 = vxor.u32 %v448, %v496
    %v545 = vxor.u32 %v449, %v497
    %v546 = vxor.u32 %v450, %v498
    %v547 = vxor.u32 %v451, %v499
    %v548 = vxor.u32 %v452, %v500
    %v549 = vxor.u32 %v453, %v501
    %v550 = vxor.u32 %v454, %v502
    %v551 = vxor.u32 %v455, %v503
    %v552 = vxor.u32 %v456, %v504
    %v553 = vxor.u32 %v457, %v505
    %v554 = vxor.u32 %v458, %v506
    %v555 = vxor.u32 %v459, %v507
    %v556 = vxor.u32 %v460, %v508
    %v557 = vxor.u32 %v461, %v509
    %v558 = vxor.u32 %v462, %v510
    %v559 = vxor.u32 %v463, %v511
    %v560 = vxor.u32 %v464, %v512
    %v561 = vxor.u32 %v465, %v513
    %v562 = vxor.u32 %v466, %v514
    %vm563 = vcmp.ge.u32.totalorder %v515, 429496729
    %vm564 = vcmp.ge.u32.totalorder %v516, 429496729
    %vm565 = vcmp.ge.u32.totalorder %v517, 429496729
    %vm566 = vcmp.ge.u32.totalorder %v518, 429496729
    %vm567 = vcmp.ge.u32.totalorder %v519, 429496729
    %vm568 = vcmp.ge.u32.totalorder %v520, 429496729
    %vm569 = vcmp.ge.u32.totalorder %v521, 429496729
    %vm570 = vcmp.ge.u32.totalorder %v522, 429496729
    %vm571 = vcmp.ge.u32.totalorder %v523, 429496729
    %vm572 = vcmp.ge.u32.totalorder %v524, 429496729
    %vm573 = vcmp.ge.u32.totalorder %v525, 429496729
    %vm574 = vcmp.ge.u32.totalorder %v526, 429496729
    %vm575 = vcmp.ge.u32.totalorder %v527, 429496729
    %vm576 = vcmp.ge.u32.totalorder %v528, 429496729
    %vm577 = vcmp.ge.u32.totalorder %v529, 429496729
    %vm578 = vcmp.ge.u32.totalorder %v530, 429496729
    %vm579 = vcmp.ge.u32.totalorder %v531, 429496729
    %vm580 = vcmp.ge.u32.totalorder %v532, 429496729
    %vm581 = vcmp.ge.u32.totalorder %v533, 429496729
    %vm582 = vcmp.ge.u32.totalorder %v534, 429496729
    %vm583 = vcmp.ge.u32.totalorder %v535, 429496729
    %vm584 = vcmp.ge.u32.totalorder %v536, 429496729
    %vm585 = vcmp.ge.u32.totalorder %v537, 429496729
    %vm586 = vcmp.ge.u32.totalorder %v538, 429496729
    %vm587 = vcmp.ge.u32.totalorder %v539, 429496729
    %vm588 = vcmp.ge.u32.totalorder %v540, 429496729
    %vm589 = vcmp.ge.u32.totalorder %v541, 429496729
    %vm590 = vcmp.ge.u32.totalorder %v542, 429496729
    %vm591 = vcmp.ge.u32.totalorder %v543, 429496729
    %vm592 = vcmp.ge.u32.totalorder %v544, 429496729
    %vm593 = vcmp.ge.u32.totalorder %v545, 429496729
    %vm594 = vcmp.ge.u32.totalorder %v546, 429496729
    %vm595 = vcmp.ge.u32.totalorder %v547, 429496729
    %vm596 = vcmp.ge.u32.totalorder %v548, 429496729
    %vm597 = vcmp.ge.u32.totalorder %v549, 429496729
    %vm598 = vcmp.ge.u32.totalorder %v550, 429496729
    %vm599 = vcmp.ge.u32.totalorder %v551, 429496729
    %vm600 = vcmp.ge.u32.totalorder %v552, 429496729
    %vm601 = vcmp.ge.u32.totalorder %v553, 429496729
    %vm602 = vcmp.ge.u32.totalorder %v554, 429496729
    %vm603 = vcmp.ge.u32.totalorder %v555, 429496729
    %vm604 = vcmp.ge.u32.totalorder %v556, 429496729
    %vm605 = vcmp.ge.u32.totalorder %v557, 429496729
    %vm606 = vcmp.ge.u32.totalorder %v558, 429496729
    %vm607 = vcmp.ge.u32.totalorder %v559, 429496729
    %vm608 = vcmp.ge.u32.totalorder %v560, 429496729
    %vm609 = vcmp.ge.u32.totalorder %v561, 429496729
    %vm610 = vcmp.ge.u32.totalorder %v562, 429496729
    %v611 = vld [vmem:[#allocation4] sm:$0xff]
    %v612 = vld [vmem:[#allocation4 + $0x8] sm:$0xff]
    %v613 = vld [vmem:[#allocation4 + $0x10] sm:$0xff]
    %v614 = vld [vmem:[#allocation4 + $0x18] sm:$0xff]
    %v615 = vld [vmem:[#allocation4 + $0x20] sm:$0xff]
    %v616 = vld [vmem:[#allocation4 + $0x28] sm:$0xff]
    %v617 = vld [vmem:[#allocation4 + $0x30] sm:$0xff]
    %v618 = vld [vmem:[#allocation4 + $0x38] sm:$0xff]
    %v619 = vld [vmem:[#allocation4 + $0x40] sm:$0xff]
    %v620 = vld [vmem:[#allocation4 + $0x48] sm:$0xff]
    %v621 = vld [vmem:[#allocation4 + $0x50] sm:$0xff]
    %v622 = vld [vmem:[#allocation4 + $0x58] sm:$0xff]
    %v623 = vld [vmem:[#allocation4 + $0x60] sm:$0xff]
    %v624 = vld [vmem:[#allocation4 + $0x68] sm:$0xff]
    %v625 = vld [vmem:[#allocation4 + $0x70] sm:$0xff]
    %v626 = vld [vmem:[#allocation4 + $0x78] sm:$0xff]
    %v627 = vld [vmem:[#allocation4 + $0x80] sm:$0xff]
    %v628 = vld [vmem:[#allocation4 + $0x88] sm:$0xff]
    %v629 = vld [vmem:[#allocation4 + $0x90] sm:$0xff]
    %v630 = vld [vmem:[#allocation4 + $0x98] sm:$0xff]
    %v631 = vld [vmem:[#allocation4 + $0xa0] sm:$0xff]
    %v632 = vld [vmem:[#allocation4 + $0xa8] sm:$0xff]
    %v633 = vld [vmem:[#allocation4 + $0xb0] sm:$0xff]
    %v634 = vld [vmem:[#allocation4 + $0xb8] sm:$0xff]
    %v635 = vld [vmem:[#allocation4 + $0xc0] sm:$0xff]
    %v636 = vld [vmem:[#allocation4 + $0xc8] sm:$0xff]
    %v637 = vld [vmem:[#allocation4 + $0xd0] sm:$0xff]
    %v638 = vld [vmem:[#allocation4 + $0xd8] sm:$0xff]
    %v639 = vld [vmem:[#allocation4 + $0xe0] sm:$0xff]
    %v640 = vld [vmem:[#allocation4 + $0xe8] sm:$0xff]
    %v641 = vld [vmem:[#allocation4 + $0xf0] sm:$0xff]
    %v642 = vld [vmem:[#allocation4 + $0xf8] sm:$0xff]
    %v643 = vld [vmem:[#allocation4 + $0x100] sm:$0xff]
    %v644 = vld [vmem:[#allocation4 + $0x108] sm:$0xff]
    %v645 = vld [vmem:[#allocation4 + $0x110] sm:$0xff]
    %v646 = vld [vmem:[#allocation4 + $0x118] sm:$0xff]
    %v647 = vld [vmem:[#allocation4 + $0x120] sm:$0xff]
    %v648 = vld [vmem:[#allocation4 + $0x128] sm:$0xff]
    %v649 = vld [vmem:[#allocation4 + $0x130] sm:$0xff]
    %v650 = vld [vmem:[#allocation4 + $0x138] sm:$0xff]
    %v651 = vld [vmem:[#allocation4 + $0x140] sm:$0xff]
    %v652 = vld [vmem:[#allocation4 + $0x148] sm:$0xff]
    %v653 = vld [vmem:[#allocation4 + $0x150] sm:$0xff]
    %v654 = vld [vmem:[#allocation4 + $0x158] sm:$0xff]
    %v655 = vld [vmem:[#allocation4 + $0x160] sm:$0xff]
    %v656 = vld [vmem:[#allocation4 + $0x168] sm:$0xff]
    %v657 = vld [vmem:[#allocation4 + $0x170] sm:$0xff]
    %v658 = vld [vmem:[#allocation4 + $0x178] sm:$0xff]
    %v659 = vmul.f32 %v611, 1.1111112
    %v660 = vmul.f32 %v612, 1.1111112
    %v661 = vmul.f32 %v613, 1.1111112
    %v662 = vmul.f32 %v614, 1.1111112
    %v663 = vmul.f32 %v615, 1.1111112
    %v664 = vmul.f32 %v616, 1.1111112
    %v665 = vmul.f32 %v617, 1.1111112
    %v666 = vmul.f32 %v618, 1.1111112
    %v667 = vmul.f32 %v619, 1.1111112
    %v668 = vmul.f32 %v620, 1.1111112
    %v669 = vmul.f32 %v621, 1.1111112
    %v670 = vmul.f32 %v622, 1.1111112
    %v671 = vmul.f32 %v623, 1.1111112
    %v672 = vmul.f32 %v624, 1.1111112
    %v673 = vmul.f32 %v625, 1.1111112
    %v674 = vmul.f32 %v626, 1.1111112
    %v675 = vmul.f32 %v627, 1.1111112
    %v676 = vmul.f32 %v628, 1.1111112
    %v677 = vmul.f32 %v629, 1.1111112
    %v678 = vmul.f32 %v630, 1.1111112
    %v679 = vmul.f32 %v631, 1.1111112
    %v680 = vmul.f32 %v632, 1.1111112
    %v681 = vmul.f32 %v633, 1.1111112
    %v682 = vmul.f32 %v634, 1.1111112
    %v683 = vmul.f32 %v635, 1.1111112
    %v684 = vmul.f32 %v636, 1.1111112
    %v685 = vmul.f32 %v637, 1.1111112
    %v686 = vmul.f32 %v638, 1.1111112
    %v687 = vmul.f32 %v639, 1.1111112
    %v688 = vmul.f32 %v640, 1.1111112
    %v689 = vmul.f32 %v641, 1.1111112
    %v690 = vmul.f32 %v642, 1.1111112
    %v691 = vmul.f32 %v643, 1.1111112
    %v692 = vmul.f32 %v644, 1.1111112
    %v693 = vmul.f32 %v645, 1.1111112
    %v694 = vmul.f32 %v646, 1.1111112
    %v695 = vmul.f32 %v647, 1.1111112
    %v696 = vmul.f32 %v648, 1.1111112
    %v697 = vmul.f32 %v649, 1.1111112
    %v698 = vmul.f32 %v650, 1.1111112
    %v699 = vmul.f32 %v651, 1.1111112
    %v700 = vmul.f32 %v652, 1.1111112
    %v701 = vmul.f32 %v653, 1.1111112
    %v702 = vmul.f32 %v654, 1.1111112
    %v703 = vmul.f32 %v655, 1.1111112
    %v704 = vmul.f32 %v656, 1.1111112
    %v705 = vmul.f32 %v657, 1.1111112
    %v706 = vmul.f32 %v658, 1.1111112
    %v707 = vsel %vm563, %v659, 0.0
    %v708 = vsel %vm564, %v660, 0.0
    %v709 = vsel %vm565, %v661, 0.0
    %v710 = vsel %vm566, %v662, 0.0
    %v711 = vsel %vm567, %v663, 0.0
    %v712 = vsel %vm568, %v664, 0.0
    %v713 = vsel %vm569, %v665, 0.0
    %v714 = vsel %vm570, %v666, 0.0
    %v715 = vsel %vm571, %v667, 0.0
    %v716 = vsel %vm572, %v668, 0.0
    %v717 = vsel %vm573, %v669, 0.0
    %v718 = vsel %vm574, %v670, 0.0
    %v719 = vsel %vm575, %v671, 0.0
    %v720 = vsel %vm576, %v672, 0.0
    %v721 = vsel %vm577, %v673, 0.0
    %v722 = vsel %vm578, %v674, 0.0
    %v723 = vsel %vm579, %v675, 0.0
    %v724 = vsel %vm580, %v676, 0.0
    %v725 = vsel %vm581, %v677, 0.0
    %v726 = vsel %vm582, %v678, 0.0
    %v727 = vsel %vm583, %v679, 0.0
    %v728 = vsel %vm584, %v680, 0.0
    %v729 = vsel %vm585, %v681, 0.0
    %v730 = vsel %vm586, %v682, 0.0
    %v731 = vsel %vm587, %v683, 0.0
    %v732 = vsel %vm588, %v684, 0.0
    %v733 = vsel %vm589, %v685, 0.0
    %v734 = vsel %vm590, %v686, 0.0
    %v735 = vsel %vm591, %v687, 0.0
    %v736 = vsel %vm592, %v688, 0.0
    %v737 = vsel %vm593, %v689, 0.0
    %v738 = vsel %vm594, %v690, 0.0
    %v739 = vsel %vm595, %v691, 0.0
    %v740 = vsel %vm596, %v692, 0.0
    %v741 = vsel %vm597, %v693, 0.0
    %v742 = vsel %vm598, %v694, 0.0
    %v743 = vsel %vm599, %v695, 0.0
    %v744 = vsel %vm600, %v696, 0.0
    %v745 = vsel %vm601, %v697, 0.0
    %v746 = vsel %vm602, %v698, 0.0
    %v747 = vsel %vm603, %v699, 0.0
    %v748 = vsel %vm604, %v700, 0.0
    %v749 = vsel %vm605, %v701, 0.0
    %v750 = vsel %vm606, %v702, 0.0
    %v751 = vsel %vm607, %v703, 0.0
    %v752 = vsel %vm608, %v704, 0.0
    %v753 = vsel %vm609, %v705, 0.0
    %v754 = vsel %vm610, %v706, 0.0
    %755 = vst [vmem:[#allocation7] sm:$0xff] %v707
    %756 = vst [vmem:[#allocation7 + $0x8] sm:$0xff] %v708
    %757 = vst [vmem:[#allocation7 + $0x10] sm:$0xff] %v709
    %758 = vst [vmem:[#allocation7 + $0x18] sm:$0xff] %v710
    %759 = vst [vmem:[#allocation7 + $0x20] sm:$0xff] %v711
    %760 = vst [vmem:[#allocation7 + $0x28] sm:$0xff] %v712
    %761 = vst [vmem:[#allocation7 + $0x30] sm:$0xff] %v713
    %762 = vst [vmem:[#allocation7 + $0x38] sm:$0xff] %v714
    %763 = vst [vmem:[#allocation7 + $0x40] sm:$0xff] %v715
    %764 = vst [vmem:[#allocation7 + $0x48] sm:$0xff] %v716
    %765 = vst [vmem:[#allocation7 + $0x50] sm:$0xff] %v717
    %766 = vst [vmem:[#allocation7 + $0x58] sm:$0xff] %v718
    %767 = vst [vmem:[#allocation7 + $0x60] sm:$0xff] %v719
    %768 = vst [vmem:[#allocation7 + $0x68] sm:$0xff] %v720
    %769 = vst [vmem:[#allocation7 + $0x70] sm:$0xff] %v721
    %770 = vst [vmem:[#allocation7 + $0x78] sm:$0xff] %v722
    %771 = vst [vmem:[#allocation7 + $0x80] sm:$0xff] %v723
    %772 = vst [vmem:[#allocation7 + $0x88] sm:$0xff] %v724
    %773 = vst [vmem:[#allocation7 + $0x90] sm:$0xff] %v725
    %774 = vst [vmem:[#allocation7 + $0x98] sm:$0xff] %v726
    %775 = vst [vmem:[#allocation7 + $0xa0] sm:$0xff] %v727
    %776 = vst [vmem:[#allocation7 + $0xa8] sm:$0xff] %v728
    %777 = vst [vmem:[#allocation7 + $0xb0] sm:$0xff] %v729
    %778 = vst [vmem:[#allocation7 + $0xb8] sm:$0xff] %v730
    %779 = vst [vmem:[#allocation7 + $0xc0] sm:$0xff] %v731
    %780 = vst [vmem:[#allocation7 + $0xc8] sm:$0xff] %v732
    %781 = vst [vmem:[#allocation7 + $0xd0] sm:$0xff] %v733
    %782 = vst [vmem:[#allocation7 + $0xd8] sm:$0xff] %v734
    %783 = vst [vmem:[#allocation7 + $0xe0] sm:$0xff] %v735
    %784 = vst [vmem:[#allocation7 + $0xe8] sm:$0xff] %v736
    %785 = vst [vmem:[#allocation7 + $0xf0] sm:$0xff] %v737
    %786 = vst [vmem:[#allocation7 + $0xf8] sm:$0xff] %v738
    %787 = vst [vmem:[#allocation7 + $0x100] sm:$0xff] %v739
    %788 = vst [vmem:[#allocation7 + $0x108] sm:$0xff] %v740
    %789 = vst [vmem:[#allocation7 + $0x110] sm:$0xff] %v741
    %790 = vst [vmem:[#allocation7 + $0x118] sm:$0xff] %v742
    %791 = vst [vmem:[#allocation7 + $0x120] sm:$0xff] %v743
    %792 = vst [vmem:[#allocation7 + $0x128] sm:$0xff] %v744
    %793 = vst [vmem:[#allocation7 + $0x130] sm:$0xff] %v745
    %794 = vst [vmem:[#allocation7 + $0x138] sm:$0xff] %v746
    %795 = vst [vmem:[#allocation7 + $0x140] sm:$0xff] %v747
    %796 = vst [vmem:[#allocation7 + $0x148] sm:$0xff] %v748
    %797 = vst [vmem:[#allocation7 + $0x150] sm:$0xff] %v749
    %798 = vst [vmem:[#allocation7 + $0x158] sm:$0xff] %v750
    %799 = vst [vmem:[#allocation7 + $0x160] sm:$0xff] %v751
    %800 = vst [vmem:[#allocation7 + $0x168] sm:$0xff] %v752
    %801 = vst [vmem:[#allocation7 + $0x170] sm:$0xff] %v753
    %802 = vst [vmem:[#allocation7 + $0x178] sm:$0xff] %v754
    // Predicated region
    $region10: #{dropout_pallas.1} parent=1 // pred_check
      _
    $region11: #{dropout_pallas.1} parent=1 // pred_check_branch
      %804 = sbr.rel (0) target = $region13
    $region12: #{dropout_pallas.1} parent=1 // pred_region
      %s806 = ssub.s32 6144, 6144
      %807 = vsyncadd [#allocation6], %s806
      %s808 = sshll.u32 [#allocation7], 4
      %s809 = int_to_ptr.vmem [resolvable:$true] %s808
      %814 = dma.vmem_to_hbm [thread:$0]  %s809, 6144, %s2, [#allocation6], 384, 384, 24
    $region13: #{dropout_pallas.1} parent=1 // pred_fallthru
      _
    // Predicated region
    $region14: #{dropout_pallas.1} parent=1 // pred_check
      _
    $region15: #{dropout_pallas.1} parent=1 // pred_check_branch
      %816 = sbr.rel (0) target = $region17
    $region16: #{dropout_pallas.1} parent=1 // pred_region
      %817 = dma.done [#allocation6], 6144
    $region17: #{dropout_pallas.1} parent=1 // pred_fallthru
      _
    %818 = vsyncpa [#allocation5], 1
    %819 = vsyncpa [#allocation6], 1

</llo_original>
